<compile_context>
chip_gen: v7x
topology: tpu7x:2x2x1
jax: 0.10.0
libtpu: 0.0.40
codegen_flags: <defaults>
</compile_context>

<pallas_src>
import functools
import math

import jax
import jax.numpy as jnp
from jax.experimental import pallas as pl
from jax.experimental.pallas import tpu as pltpu

_EPS = 1e-8
_LANE = 128
_MIN_PARALLEL_TILES = 4       # keep both v7x TensorCores fed via "parallel" axes


def _cdiv(a: int, b: int) -> int:
    return -(-a // b)


def _round_up(x: int, m: int) -> int:
    return ((x + m - 1) // m) * m


def _round_down(x: int, m: int) -> int:
    return max(m, (x // m) * m)


def _sublane_rows(dtype) -> int:
    # Rows per vreg tile along the second-minor axis: 8 (f32), 16 (bf16), ...
    return 8 * max(1, 4 // jnp.dtype(dtype).itemsize)


def _per_elem_bytes(dtype) -> int:
    # Input/output live in the double buffers at the input dtype; the kernel
    # body additionally materializes f32 working copies -> budget both.
    return jnp.dtype(dtype).itemsize + 4


@functools.lru_cache(maxsize=None)
def _budgets():
    """Returns (tile_byte_budget, vmem_limit_bytes, small_2d_elems) per generation."""
    phys = None
    try:
        info = pltpu.get_tpu_info()
        phys = getattr(info, "vmem_capacity_bytes", None)
    except Exception:  # query unavailable -> assume the tightest generation
        phys = None
    if not phys or phys <= 0:
        phys = 64 * 1024 * 1024
    if phys >= 100 * 1024 * 1024:
        # v5e / v6e class: 128 MiB physical VMEM, <= ~1.4 TB/s HBM.
        return 12 * 1024 * 1024, 64 * 1024 * 1024, 128 * 1024
    # v7x class: 64 MiB physical VMEM, ~3.2 TB/s HBM -> per-step overhead is a
    # larger fraction (bigger XLA-fallback crossover), scoped limit kept at 48 MiB.
    return 10 * 1024 * 1024, 48 * 1024 * 1024, 256 * 1024


def _split_for_parallelism(n_outer: int, length: int, tile: int, unit: int,
                           floor: int) -> int:
    """Shrink `tile` (to `unit` multiples) until the parallel grid has enough steps."""
    while n_outer * _cdiv(length, tile) < _MIN_PARALLEL_TILES:
        new_tile = _round_down(tile // 2, unit)
        if new_tile < floor or new_tile >= tile:
            break
        tile = new_tile
    return tile


# --------------------------------------------------------------------------
# Kernel A: (N, C, L/128, 128) layout — spatial on sublanes AND lanes,
#            channel reduce = C-1 plain VPU adds over dense slabs.
# --------------------------------------------------------------------------
def _pixelnorm_stacked_kernel(x_ref, o_ref):
    x = x_ref[...].astype(jnp.float32)                       # (1, C, tile_rows, 128)
    ms = jnp.mean(x * x, axis=1, keepdims=True)              # (1, 1, tile_rows, 128)
    o_ref[...] = (x * jax.lax.rsqrt(ms + _EPS)).astype(o_ref.dtype)


def _pixelnorm_stacked(x4: jax.Array) -> jax.Array:
    n, c, lr, lane = x4.shape
    tile_bytes, vmem_limit, _ = _budgets()
    pack = _sublane_rows(x4.dtype)
    per_row = c * lane * _per_elem_bytes(x4.dtype)           # one 128-wide spatial row
    cap = max(pack, tile_bytes // per_row)
    tile_rows = lr if lr <= cap else _round_down(cap, pack)
    tile_rows = _split_for_parallelism(n, lr, tile_rows, pack, floor=4 * pack)
    grid = (n, _cdiv(lr, tile_rows))                         # edge tiles masked
    return pl.pallas_call(
        _pixelnorm_stacked_kernel,
        out_shape=jax.ShapeDtypeStruct(x4.shape, x4.dtype),
        grid_spec=pltpu.PrefetchScalarGridSpec(
            num_scalar_prefetch=0,
            grid=grid,
            in_specs=[pl.BlockSpec((1, c, tile_rows, lane),
                                   lambda i, j: (i, 0, j, 0))],
            out_specs=pl.BlockSpec((1, c, tile_rows, lane),
                                   lambda i, j: (i, 0, j, 0)),
        ),
        compiler_params=pltpu.CompilerParams(
            dimension_semantics=("parallel", "parallel"),
            vmem_limit_bytes=vmem_limit,
        ),
    )(x4)


# --------------------------------------------------------------------------
# Kernel B: (N, C, L) layout — channels on sublanes, spatial on lanes.
#            Fallback for spatial extents that aren't 128-multiples.
# --------------------------------------------------------------------------
def _pixelnorm_ncl_kernel(x_ref, o_ref):
    x = x_ref[...].astype(jnp.float32)                       # (1, C, tile_l)
    ms = jnp.mean(x * x, axis=1, keepdims=True)              # (1, 1, tile_l)
    o_ref[...] = (x * jax.lax.rsqrt(ms + _EPS)).astype(o_ref.dtype)


def _pixelnorm_ncl(x3: jax.Array) -> jax.Array:
    n, c, l = x3.shape
    tile_bytes, vmem_limit, _ = _budgets()
    pack = _sublane_rows(x3.dtype)
    padded_c = _round_up(c, pack)                            # block pads C to the sublane pack
    per_lane = padded_c * _per_elem_bytes(x3.dtype)
    cap = max(_LANE, tile_bytes // per_lane)
    if l <= _LANE:
        tile_l = l
    else:
        # Round down to a 128-multiple even when the whole L fits, so only the
        # final edge tile gets masked (vst.msk) stores.
        tile_l = _round_down(min(l, cap), _LANE)
    tile_l = _split_for_parallelism(n, l, tile_l, _LANE, floor=4 * _LANE)
    grid = (n, _cdiv(l, tile_l))                             # edge tiles masked
    return pl.pallas_call(
        _pixelnorm_ncl_kernel,
        out_shape=jax.ShapeDtypeStruct((n, c, l), x3.dtype),
        grid_spec=pltpu.PrefetchScalarGridSpec(
            num_scalar_prefetch=0,
            grid=grid,
            in_specs=[pl.BlockSpec((1, c, tile_l), lambda i, j: (i, 0, j))],
            out_specs=pl.BlockSpec((1, c, tile_l), lambda i, j: (i, 0, j)),
        ),
        compiler_params=pltpu.CompilerParams(
            dimension_semantics=("parallel", "parallel"),
            vmem_limit_bytes=vmem_limit,
        ),
    )(x3)


# --------------------------------------------------------------------------
# Kernel C: (rows, C) layout — channels on lanes (2-D inputs with C >= 128).
# --------------------------------------------------------------------------
def _pixelnorm_rows_kernel(x_ref, o_ref):
    x = x_ref[...].astype(jnp.float32)                       # (block_rows, C)
    ms = jnp.mean(x * x, axis=-1, keepdims=True)             # (block_rows, 1)
    o_ref[...] = (x * jax.lax.rsqrt(ms + _EPS)).astype(o_ref.dtype)


def _pixelnorm_2d_pallas(x2: jax.Array) -> jax.Array:
    rows, c = x2.shape
    tile_bytes, vmem_limit, _ = _budgets()
    pack = _sublane_rows(x2.dtype)
    per_row = _round_up(c, _LANE) * _per_elem_bytes(x2.dtype)  # lane-padded footprint
    cap = max(pack, tile_bytes // per_row)
    block_rows = rows if rows <= cap else _round_down(cap, pack)
    block_rows = _split_for_parallelism(1, rows, block_rows, pack, floor=4 * pack)
    grid = (_cdiv(rows, block_rows),)                        # edge tiles masked
    return pl.pallas_call(
        _pixelnorm_rows_kernel,
        out_shape=jax.ShapeDtypeStruct((rows, c), x2.dtype),
        grid_spec=pltpu.PrefetchScalarGridSpec(
            num_scalar_prefetch=0,
            grid=grid,
            in_specs=[pl.BlockSpec((block_rows, c), lambda i: (i, 0))],
            out_specs=pl.BlockSpec((block_rows, c), lambda i: (i, 0)),
        ),
        compiler_params=pltpu.CompilerParams(
            dimension_semantics=("parallel",),
            vmem_limit_bytes=vmem_limit,
        ),
    )(x2)


# --------------------------------------------------------------------------
# Public entry point (matches torch PixelNorm.forward, reduction over dim=1).
# --------------------------------------------------------------------------
def _reference(x: jax.Array) -> jax.Array:
    # f32 accumulation, same as the kernel paths (keeps bf16 numerics consistent).
    xf = x.astype(jnp.float32)
    ms = jnp.mean(xf * xf, axis=1, keepdims=True)
    return (xf * jax.lax.rsqrt(ms + _EPS)).astype(x.dtype)


def pixel_norm(x: jax.Array) -> jax.Array:
    if x.ndim < 2:
        raise ValueError(f"PixelNorm needs rank >= 2, got {x.ndim}")

    _, vmem_limit, small_2d_elems = _budgets()
    pack = _sublane_rows(x.dtype)
    per_elem = _per_elem_bytes(x.dtype)

    if x.ndim == 2:
        rows, c = x.shape
        min_block = pack * _round_up(c, _LANE) * per_elem * 4   # 2 in + 2 out buffers
        if rows * c < small_2d_elems or c < _LANE or min_block > vmem_limit:
            # Tiny latent codes / lane-sparse or VMEM-hostile channel dims:
            # XLA fusion beats the fixed pallas_call + per-grid-step overhead.
            return _reference(x)
        return _pixelnorm_2d_pallas(x)

    # Rank >= 3: N, C, *spatial  ->  free view over flattened spatial, no transposes.
    n, c = x.shape[0], x.shape[1]
    l = math.prod(x.shape[2:])
    min_block = c * pack * _LANE * per_elem * 4                 # 2 in + 2 out buffers
    if l < _LANE or min_block > vmem_limit:
        # Spatial extent too small to fill lanes, or channel dim so large that
        # even a minimal block overflows the scoped VMEM limit: let XLA fuse it.
        return _reference(x)
    if l % _LANE == 0:
        y = _pixelnorm_stacked(x.reshape(n, c, l // _LANE, _LANE))
    else:
        y = _pixelnorm_ncl(x.reshape(n, c, l))
    return y.reshape(x.shape)


if __name__ == "__main__":
    key = jax.random.PRNGKey(0)

    # 4-D NCHW conv-style input (L = 256, a 128-multiple -> stacked-spatial kernel).
    x = jax.random.normal(key, (2, 4, 16, 16), dtype=jnp.float32)
    out = jax.block_until_ready(pixel_norm(x))
    assert out.shape == x.shape and out.dtype == x.dtype
    assert jnp.allclose(out, _reference(x), atol=1e-5, rtol=1e-5)

    # Odd spatial size (L = 169, not a 128-multiple) -> NCL sublane-reduce kernel.
    x_odd = jax.random.normal(jax.random.PRNGKey(3), (2, 4, 13, 13), dtype=jnp.float32)
    out_odd = jax.block_until_ready(pixel_norm(x_odd))
    assert jnp.allclose(out_odd, _reference(x_odd), atol=1e-5, rtol=1e-5)

    # 2-D latent-code path from the latent mapper (tiny -> intentional XLA
    # fallback; still semantics-checked).
    z = jax.random.normal(jax.random.PRNGKey(1), (8, 32), dtype=jnp.float32)
    out_z = jax.block_until_ready(pixel_norm(z))
    assert jnp.allclose(out_z, _reference(z), atol=1e-5, rtol=1e-5)

    # Larger 2-D input -> lane-reduction Pallas kernel (and >=4 parallel tiles).
    w = jax.random.normal(jax.random.PRNGKey(2), (1024, 256), dtype=jnp.float32)
    out_w = jax.block_until_ready(pixel_norm(w))
    assert jnp.allclose(out_w, _reference(w), atol=1e-5, rtol=1e-5)

    print("KERNEL_OK")
</pallas_src>

<mosaic_0001>
module attributes {stable_mosaic.version = 11 : i64} {
  func.func @_pixelnorm_stacked_kernel(%arg0: i32, %arg1: i32, %arg2: memref<1x4x2x128xf32, #tpu.memory_space<vmem>>, %arg3: memref<1x4x2x128xf32, #tpu.memory_space<vmem>>) attributes {dimension_semantics = [#tpu.dimension_semantics<parallel>, #tpu.dimension_semantics<parallel>], iteration_bounds = array<i64: 2, 1>, scalar_prefetch = 0 : i64, scratch_operands = 0 : i64, tpu.core_type = #tpu.core_type<tc>, window_params = [{transform_indices = @transform_0, window_bounds = array<i64: 1, 4, 2, 128>}, {transform_indices = @transform_1, window_bounds = array<i64: 1, 4, 2, 128>}]} {
    %c0 = arith.constant 0 : index
    %c0_0 = arith.constant 0 : index
    %c0_1 = arith.constant 0 : index
    %c0_2 = arith.constant 0 : index
    %0 = vector.load %arg2[%c0, %c0_0, %c0_1, %c0_2] : memref<1x4x2x128xf32, #tpu.memory_space<vmem>>, vector<1x4x2x128xf32>
    %1 = arith.mulf %0, %0 : vector<1x4x2x128xf32>
    %cst = arith.constant dense<0.000000e+00> : vector<1x2x128xf32>
    %2 = vector.multi_reduction <add>, %1, %cst [1] : vector<1x4x2x128xf32> to vector<1x2x128xf32>
    %3 = vector.shape_cast %2 : vector<1x2x128xf32> to vector<1x1x2x128xf32>
    %cst_3 = arith.constant 4.000000e+00 : f32
    %4 = vector.broadcast %cst_3 : f32 to vector<1x1x2x128xf32>
    %5 = arith.divf %3, %4 : vector<1x1x2x128xf32>
    %cst_4 = arith.constant 9.99999993E-9 : f32
    %6 = vector.broadcast %cst_4 : f32 to vector<1x1x2x128xf32>
    %7 = arith.addf %5, %6 : vector<1x1x2x128xf32>
    %8 = math.rsqrt %7 : vector<1x1x2x128xf32>
    %9 = vector.broadcast %8 : vector<1x1x2x128xf32> to vector<1x4x2x128xf32>
    %10 = arith.mulf %0, %9 : vector<1x4x2x128xf32>
    %c0_5 = arith.constant 0 : index
    %c0_6 = arith.constant 0 : index
    %c0_7 = arith.constant 0 : index
    %c0_8 = arith.constant 0 : index
    %11 = vector.load %arg3[%c0_5, %c0_6, %c0_7, %c0_8] : memref<1x4x2x128xf32, #tpu.memory_space<vmem>>, vector<1x4x2x128xf32>
    tpu.vector_store %arg3[%c0_5, %c0_6, %c0_7, %c0_8], %10 {strides = array<i32>} : memref<1x4x2x128xf32, #tpu.memory_space<vmem>>, vector<1x4x2x128xf32>,
    return
  }
  func.func @transform_0(%arg0: i32, %arg1: i32) -> (i32, i32, i32, i32) {
    %c0_i32 = arith.constant 0 : i32
    %c0_i32_0 = arith.constant 0 : i32
    %c0_i32_1 = arith.constant 0 : i32
    return %arg0, %c0_i32, %arg1, %c0_i32_0 : i32, i32, i32, i32
  }
  func.func @transform_1(%arg0: i32, %arg1: i32) -> (i32, i32, i32, i32) {
    %c0_i32 = arith.constant 0 : i32
    %c0_i32_0 = arith.constant 0 : i32
    %c0_i32_1 = arith.constant 0 : i32
    return %arg0, %c0_i32, %arg1, %c0_i32_0 : i32, i32, i32, i32
  }
}

</mosaic_0001>

<llo_original>
// kernel: tpu_custom_call.1
$region0: #{tpu_custom_call.1}
  #allocation0 [shape = 'u32[]', space=smem, size = 0x4, offset = 0x4, fixed_abs, tag = 'smem constant byte address 0x4 - core index']
  #allocation1 [shape = 'u32[144,128]{1,0:T(1,128)}', space=vmem, size = 0x12000, scoped, tag = 'internal scratch']
  %s0 = inlined_call_operand.hbm [shape: f32[2,4,2,128], index: 0, kind: input, shape index: {}]
  %s1 = inlined_call_operand.hbm [shape: f32[2,4,2,128], index: 1, kind: output, shape index: {}]
  %s2 = sld [smem:[#allocation0]]
  $region41: #{tpu_custom_call.1} parent=0
    _
  %s4 = ssub.s32 1, %s2
  %s5 = scalar_select 0, %s4, %s2
  $region1: #{tpu_custom_call.1} parent=0
    #allocation2 [shape = 'u8[8192]{0}', space=vmem, size = 0x2000, scoped, tag = 'input window, operand 0']
    #allocation3 [shape = 's32[2]{0}', space=sflag, size = 0x8, scoped, tag = 'scoped memory for tpu_custom_call.1']
    #allocation4 [shape = 's32[2]{0}', space=sflag, size = 0x8, scoped, tag = 'scoped memory for tpu_custom_call.1']
    #allocation5 [shape = 'u8[8192]{0}', space=vmem, size = 0x2000, scoped, tag = 'output window, operand 0']
    %6 = vsyncpa [#allocation3], 0
    %s7 = scalar_lea.sflag [#allocation3], 1
    %8 = vsyncpa %s7, 0
    %9 = vsyncpa [#allocation4], 0
    %s10 = scalar_lea.sflag [#allocation4], 1
    %11 = vsyncpa %s10, 0
    loop: start=0, step=1, limit=4
    $region2: #{tpu_custom_call.1} parent=1 // loop_pre_header
      _
    $region3: #{tpu_custom_call.1} parent=1 // loop_header
      %s13 = sphi 0, %s17
      %p14 = scmp.ge.s32.totalorder %s13, 4
      %s20 = sphi 0, %s32
      %s21 = sphi 0, %s28
      %s22 = sphi 0, %s20
      %s23 = sphi 0, %s21
      %s24 = sphi 0, %s22
      %s25 = sphi 0, %s23
      %s37 = sphi 0, %s39
      %s40 = sphi 0, %s37
      %s41 = sphi 0, %s40
      %s57 = sphi 0, %s41
      %s65 = sphi 0, %s67
      %s68 = sphi 0, %s65
      %s69 = sphi 0, %s68
      %s85 = sphi 0, %s69
    $region4: #{tpu_custom_call.1} parent=1 // loop_header_branch
      %16 = sbr.rel (%p14) target = $region8
    $region5: #{tpu_custom_call.1} parent=1 // loop_body
      %s18 = ssub.s32 %s13, 1
      %s19 = ssub.s32 %s13, 2
      %s26 = sadd.s32 1, %s21
      %p27 = scmp.ge.s32.totalorder %s26, 1
      %s28 = scalar_select %p27, 0, %s26
      %s29 = sadd.s32 1, %s20
      %s30 = scalar_select %p27, %s29, %s20
      %p31 = scmp.ge.s32.totalorder %s30, 2
      %s32 = scalar_select %p31, 0, %s30
      %s33 = ssub.s32 %s20, %s32
      %s34 = ssub.s32 %s21, %s28
      %s35 = sor.u32 %s33, %s34
      %p36 = scmp.eq.s32.totalorder %s35, 0
      %s38 = sadd.s32 %s37, 1
      %s39 = scalar_select %p36, %s37, %s38
      %p42 = pneg %p36
      %p43 = scmp.eq.s32.totalorder %s13, 1
      %p44 = por %p42, %p43
      %p45 = scmp.ne.s32.totalorder %s37, %s40
      %p46 = scmp.eq.s32.totalorder %s13, 0
      %p47 = por %p45, %p46
      %p48 = scmp.ne.s32.totalorder %s37, %s40
      %p49 = scmp.eq.s32.totalorder %s18, 1
      %p50 = por %p48, %p49
      %p51 = scmp.ne.s32.totalorder %s40, %s41
      %p52 = scmp.eq.s32.totalorder %s18, 0
      %p53 = por %p51, %p52
      %p54 = scmp.ne.s32.totalorder %s40, %s41
      %p55 = scmp.eq.s32.totalorder %s19, 1
      %p56 = por %p54, %p55
      %p58 = scmp.ne.s32.totalorder %s41, %s57
      %p59 = scmp.eq.s32.totalorder %s19, 0
      %p60 = por %p58, %p59
      %s61 = ssub.s32 %s20, %s32
      %s62 = ssub.s32 %s21, %s28
      %s63 = sor.u32 %s61, %s62
      %p64 = scmp.eq.s32.totalorder %s63, 0
      %s66 = sadd.s32 %s65, 1
      %s67 = scalar_select %p64, %s65, %s66
      %p70 = pneg %p64
      %p71 = scmp.eq.s32.totalorder %s13, 1
      %p72 = por %p70, %p71
      %p73 = scmp.ne.s32.totalorder %s65, %s68
      %p74 = scmp.eq.s32.totalorder %s13, 0
      %p75 = por %p73, %p74
      %p76 = scmp.ne.s32.totalorder %s65, %s68
      %p77 = scmp.eq.s32.totalorder %s18, 1
      %p78 = por %p76, %p77
      %p79 = scmp.ne.s32.totalorder %s68, %s69
      %p80 = scmp.eq.s32.totalorder %s18, 0
      %p81 = por %p79, %p80
      %p82 = scmp.ne.s32.totalorder %s68, %s69
      %p83 = scmp.eq.s32.totalorder %s19, 1
      %p84 = por %p82, %p83
      %p86 = scmp.ne.s32.totalorder %s69, %s85
      %p87 = scmp.eq.s32.totalorder %s19, 0
      %p88 = por %p86, %p87
      %p89 = scmp.le.s32.totalorder 1, %s13
      %p90 = scmp.lt.s32.totalorder %s13, 3
      %p91 = pnand %p89, %p90
      %p92 = pneg %p91
      // Predicated region
      $region9: #{tpu_custom_call.1} parent=5 // pred_check
        _
      $region10: #{tpu_custom_call.1} parent=5 // pred_check_branch
        %94 = sbr.rel (%p91) target = $region12
      $region11: #{tpu_custom_call.1} parent=5 // pred_region
        %s95 = ssub.s32 %s13, 1
      $region12: #{tpu_custom_call.1} parent=5 // pred_fallthru
        _
      %p96 = scmp.lt.s32.totalorder %s13, 2
      // Predicated region
      $region13: #{tpu_custom_call.1} parent=5 // pred_check
        %p97 = pneg %p96
      $region14: #{tpu_custom_call.1} parent=5 // pred_check_branch
        %99 = sbr.rel (%p97) target = $region16
      $region15: #{tpu_custom_call.1} parent=5 // pred_region
        // Predicated region
        $region17: #{tpu_custom_call.1} parent=15 // pred_check
          %p100 = pneg %p47
        $region18: #{tpu_custom_call.1} parent=15 // pred_check_branch
          %102 = sbr.rel (%p100) target = $region20
        $region19: #{tpu_custom_call.1} parent=15 // pred_region
          %s103 = sand.u32 %s37, 1
          %s104 = scalar_lea.sflag [#allocation3], %s103
          %s105 = sand.u32 %s37, 1
          %s106 = smul.addr %s105, 8
          %s107 = scalar_lea.vmem [#allocation2], %s106
          %s109 = ssub.s32 128, 128
          %110 = vsyncadd %s104, %s109
          %s111 = smul.addr %s20, 4
          %s112 = sadd.s32 %s21, %s111
          %s113 = smul.addr %s112, 32
          %s114 = scalar_lea.hbm %s0, %s113
          %s115 = sshll.u32 %s107, 4
          %s116 = int_to_ptr.vmem [resolvable:$true] %s115
          %121 = dma.hbm_to_vmem [thread:$0]  %s114, 128, %s116, %s104, 32, 32, 2
        $region20: #{tpu_custom_call.1} parent=15 // pred_fallthru
          _
      $region16: #{tpu_custom_call.1} parent=5 // pred_fallthru
        _
      %p122 = scmp.le.s32.totalorder 1, %s13
      %p123 = scmp.lt.s32.totalorder %s13, 3
      %p124 = pnand %p122, %p123
      %p125 = pneg %p124
      // Predicated region
      $region21: #{tpu_custom_call.1} parent=5 // pred_check
        _
      $region22: #{tpu_custom_call.1} parent=5 // pred_check_branch
        %127 = sbr.rel (%p124) target = $region24
      $region23: #{tpu_custom_call.1} parent=5 // pred_region
        %s128 = ssub.s32 %s13, 1
        %s129 = sand.u32 %s40, 1
        %s130 = scalar_lea.sflag [#allocation3], %s129
        %s131 = sand.u32 %s40, 1
        %s132 = smul.addr %s131, 8
        %s133 = scalar_lea.vmem [#allocation2], %s132
        // Predicated region
        $region25: #{tpu_custom_call.1} parent=23 // pred_check
          %p134 = pneg %p53
        $region26: #{tpu_custom_call.1} parent=23 // pred_check_branch
          %136 = sbr.rel (%p134) target = $region28
        $region27: #{tpu_custom_call.1} parent=23 // pred_region
          %137 = dma.done %s130, 128
        $region28: #{tpu_custom_call.1} parent=23 // pred_fallthru
          _
        %s138 = sand.u32 %s40, 1
        %s139 = scalar_lea.sflag [#allocation3], %s138
        %s140 = sand.u32 %s40, 1
        %s141 = smul.addr %s140, 8
        %s142 = scalar_lea.vmem [#allocation2], %s141
        %p143 = pneg %p53
        %p144 = pneg %p50
        %p145 = pneg %p81
        %p146 = pneg %p78
        %s147 = sand.u32 %s68, 1
        %s148 = scalar_lea.sflag [#allocation4], %s147
        %s149 = sand.u32 %s68, 1
        %s150 = smul.addr %s149, 8
        %s151 = scalar_lea.vmem [#allocation5], %s150
        %v152 = vld [vmem:[%s133] sm:$0x3]
        %v153 = vld [vmem:[%s133 + $0x2] sm:$0x3]
        %v154 = vld [vmem:[%s133 + $0x4] sm:$0x3]
        %v155 = vld [vmem:[%s133 + $0x6] sm:$0x3]
        %v156 = vmul.f32 %v152, %v152
        %v157 = vmul.f32 %v153, %v153
        %v158 = vmul.f32 %v154, %v154
        %v159 = vmul.f32 %v155, %v155
        %vm160 = vcmask 1041408
        %v161 = vsel %vm160, %v156, 0.0
        %v162 = vsel %vm160, %v157, 0.0
        %v163 = vadd.f32 %v161, %v162
        %v164 = vsel %vm160, %v158, 0.0
        %v165 = vadd.f32 %v163, %v164
        %v166 = vsel %vm160, %v159, 0.0
        %v167 = vadd.f32 %v165, %v166
        %v168 = vrcp.pop 4.0
        %v169 = vmul.f32 %v167, %v168
        %v170 = vadd.f32 %v169, 1e-08
        %v171 = vrsqrt.pop %v170
        %v172 = vmul.f32 %v152, %v171
        %v173 = vmul.f32 %v153, %v171
        %v174 = vmul.f32 %v154, %v171
        %v175 = vmul.f32 %v155, %v171
        %176 = vst [vmem:[%s151] sm:$0x3] %v172
        %177 = vst [vmem:[%s151 + $0x2] sm:$0x3] %v173
        %178 = vst [vmem:[%s151 + $0x4] sm:$0x3] %v174
        %179 = vst [vmem:[%s151 + $0x6] sm:$0x3] %v175
        %s180 = sand.u32 %s68, 1
        %s181 = scalar_lea.sflag [#allocation4], %s180
        %s182 = sand.u32 %s68, 1
        %s183 = smul.addr %s182, 8
        %s184 = scalar_lea.vmem [#allocation5], %s183
        // Predicated region
        $region29: #{tpu_custom_call.1} parent=23 // pred_check
          %p185 = pneg %p78
        $region30: #{tpu_custom_call.1} parent=23 // pred_check_branch
          %187 = sbr.rel (%p185) target = $region32
        $region31: #{tpu_custom_call.1} parent=23 // pred_region
          %s189 = ssub.s32 128, 128
          %190 = vsyncadd %s181, %s189
          %s191 = smul.addr %s22, 4
          %s192 = sadd.s32 %s23, %s191
          %s193 = smul.addr %s192, 32
          %s194 = scalar_lea.hbm %s1, %s193
          %s195 = sshll.u32 %s184, 4
          %s196 = int_to_ptr.vmem [resolvable:$true] %s195
          %201 = dma.vmem_to_hbm [thread:$0]  %s196, 128, %s194, %s181, 32, 32, 2
        $region32: #{tpu_custom_call.1} parent=23 // pred_fallthru
          _
      $region24: #{tpu_custom_call.1} parent=5 // pred_fallthru
        _
      %p202 = scmp.le.s32.totalorder 2, %s13
      // Predicated region
      $region33: #{tpu_custom_call.1} parent=5 // pred_check
        %p203 = pneg %p202
      $region34: #{tpu_custom_call.1} parent=5 // pred_check_branch
        %205 = sbr.rel (%p203) target = $region36
      $region35: #{tpu_custom_call.1} parent=5 // pred_region
        %s206 = ssub.s32 %s13, 2
        // Predicated region
        $region37: #{tpu_custom_call.1} parent=35 // pred_check
          %p207 = pneg %p84
        $region38: #{tpu_custom_call.1} parent=35 // pred_check_branch
          %209 = sbr.rel (%p207) target = $region40
        $region39: #{tpu_custom_call.1} parent=35 // pred_region
          %s210 = sand.u32 %s69, 1
          %s211 = scalar_lea.sflag [#allocation4], %s210
          %s212 = sand.u32 %s69, 1
          %s213 = smul.addr %s212, 8
          %s214 = scalar_lea.vmem [#allocation5], %s213
          %215 = dma.done %s211, 128
        $region40: #{tpu_custom_call.1} parent=35 // pred_fallthru
          _
      $region36: #{tpu_custom_call.1} parent=5 // pred_fallthru
        _
    $region6: #{tpu_custom_call.1} parent=1 // loop_footer
      %s17 = sadd.s32 1, %s13
    $region7: #{tpu_custom_call.1} parent=1 // loop_footer_branch
      %12 = sbr.rel target = $region3
    $region8: #{tpu_custom_call.1} parent=1 // loop_exit
      _
    %216 = vsyncpa [#allocation3], 1
    %s217 = scalar_lea.sflag [#allocation3], 1
    %218 = vsyncpa %s217, 1
    %219 = vsyncpa [#allocation4], 1
    %s220 = scalar_lea.sflag [#allocation4], 1
    %221 = vsyncpa %s220, 1

</llo_original>
